<compile_context>
chip_gen: v6e
topology: v6e:2x2x1
jax: 0.10.0
libtpu: 0.0.40
codegen_flags: <defaults>
</compile_context>

<pallas_src>
import jax
import jax.numpy as jnp
from jax import lax
from jax.experimental import pallas as pl
from jax.experimental.pallas import tpu as pltpu

STATE_PAD_IDX = 0


def _state_embed_kernel(idx_ref, wt_ref, o_ref):
    """One grid step: embed + sum-over-P for a (tile_bt, tile_hw) slab.

    idx_ref: (TBT, P, THW) int     property indices, native layout / native int dtype
    wt_ref : (E, V)        float32 transposed embedding table
    o_ref  : (TBT, E, THW) float32 summed embeddings, channels-first
    """
    tbt, p_slots, thw = idx_ref.shape
    e, v = wt_ref.shape

    wt = wt_ref[...]                                         # (E, V), tiny; hoisted
    vocab = lax.broadcasted_iota(jnp.int32, (v, thw), 0)     # V on sublanes, THW on lanes

    def one_slab(b):
        idx = idx_ref[b].astype(jnp.int32)                   # (P, THW); in-VMEM cast, free
        counts = jnp.zeros((v, thw), jnp.int32)
        for p in range(p_slots):                             # P is small & static
            counts = counts + (idx[p, :][None, :] == vocab).astype(jnp.int32)
        # (E,V) @ (V,THW) on the MXU == sum_p W[idx[p,:],:]^T; lane axis = spatial.
        o_ref[b] = jnp.dot(wt, counts.astype(jnp.float32),
                           preferred_element_type=jnp.float32)

    if tbt <= 8:
        # Small slab count: full static unroll (max LLO visibility, no loop overhead).
        for b in range(tbt):
            one_slab(b)
    else:
        # Large slab count: fori_loop bounds vreg live ranges / code size; modest
        # unroll keeps the scheduler fed without spilling the 64-vreg file.
        lax.fori_loop(0, tbt, lambda b, carry: (one_slab(b), carry)[1], None, unroll=4)


def _pick_tiles(bt, hw, p, e, idx_itemsize, budget_bytes=4 << 20):
    """Choose (tile_bt, tile_hw).

    tile_hw: largest lane-dense (multiple-of-128) candidate dividing HW, capped at
             2048 so per-slab intermediates (counts / dot result) stay vreg-friendly;
             falls back to the full HW axis (always a legal block) otherwise.
    tile_bt: largest divisor of BT keeping the combined in+out block under
             `budget_bytes` (~4 MiB -> ~8 MiB double-buffered: fits the 16 MiB v5e
             scoped default, lots of headroom on v6e / v7x's 64 MiB), while keeping
             >= 2 grid steps when possible so both v7x TensorCores get work.
    """
    tile_hw = hw
    for cand in (2048, 1024, 512, 256, 128):
        if hw % cand == 0:
            tile_hw = cand
            break

    hw_steps = hw // tile_hw
    bytes_per_bt = tile_hw * (p * idx_itemsize + e * 4)
    min_bt_steps = 2 if (hw_steps == 1 and bt >= 2) else 1

    tile_bt = 1
    for t in range(1, bt + 1):
        if bt % t == 0 and t * bytes_per_bt <= budget_bytes and (bt // t) >= min_bt_steps:
            tile_bt = t
    return tile_bt, tile_hw


@jax.jit
def state_embedder_forward(x, weight):
    """x: (B, T, P, H, W) int; weight: (V, E) float -> (B, T, E, H, W) float32."""
    B, T, P, H, W = x.shape
    V, E = weight.shape
    BT, HW = B * T, H * W

    # Free reshapes only: no wrapper-side transposes, pads, or dtype casts of x
    # (those would each be a full extra HBM pass before the kernel starts).
    idx = x.reshape(BT, P, HW)                          # native int dtype preserved
    w_t = jnp.transpose(weight).astype(jnp.float32)     # (E, V); only V*E*4 bytes

    tile_bt, tile_hw = _pick_tiles(BT, HW, P, E, idx.dtype.itemsize)
    grid = (BT // tile_bt, HW // tile_hw)

    in_blk = tile_bt * P * tile_hw * idx.dtype.itemsize
    out_blk = tile_bt * E * tile_hw * 4
    vmem_need = 2 * (in_blk + out_blk) + V * E * 4 + (2 << 20)   # dbl-buffer + table + slack
    cp_kwargs = dict(dimension_semantics=("parallel", "parallel"))
    if vmem_need > (16 << 20):   # only override when the plan outgrows the smallest default
        cp_kwargs["vmem_limit_bytes"] = int(vmem_need)

    cost = pl.CostEstimate(
        flops=2 * BT * HW * E * V + BT * HW * P * V,    # one-hot matmul + compares
        transcendentals=0,
        bytes_accessed=idx.size * idx.dtype.itemsize + V * E * 4 + BT * E * HW * 4,
    )

    out = pl.pallas_call(
        _state_embed_kernel,
        out_shape=jax.ShapeDtypeStruct((BT, E, HW), jnp.float32),
        grid_spec=pltpu.PrefetchScalarGridSpec(
            num_scalar_prefetch=0,
            grid=grid,
            in_specs=[
                pl.BlockSpec((tile_bt, P, tile_hw), lambda i, j: (i, 0, j)),
                pl.BlockSpec((E, V), lambda i, j: (0, 0)),   # full transposed table
            ],
            out_specs=pl.BlockSpec((tile_bt, E, tile_hw), lambda i, j: (i, 0, j)),
        ),
        compiler_params=pltpu.CompilerParams(**cp_kwargs),
        cost_estimate=cost,
    )(idx, w_t)

    # (BT, E, HW) is already channels-first -> free reshape to (B, T, E, H, W).
    return out.reshape(B, T, E, H, W)


def make_embedding_weight(key, num_properties, emb_dim):
    """Deterministic xavier_normal_-style init of the embedding table."""
    std = (2.0 / (num_properties + emb_dim)) ** 0.5
    return std * jax.random.normal(key, (num_properties, emb_dim), dtype=jnp.float32)


if __name__ == "__main__":
    # Small, module-consistent shapes.
    B, T, P, H, W = 2, 3, 4, 8, 8       # batch, time, property slots, spatial
    num_properties, emb_dim = 16, 32

    key = jax.random.PRNGKey(0)
    k_w, k_x = jax.random.split(key)

    weight = make_embedding_weight(k_w, num_properties, emb_dim)
    x = jax.random.randint(k_x, (B, T, P, H, W), 0, num_properties, dtype=jnp.int32)

    out = state_embedder_forward(x, weight)
    out = jax.block_until_ready(out)

    # Pure-JAX reference of the PyTorch forward.
    ref = jnp.take(weight, x, axis=0)           # (B, T, P, H, W, E)
    ref = jnp.sum(ref, axis=2)                  # (B, T, H, W, E)
    ref = jnp.transpose(ref, (0, 1, 4, 2, 3))   # (B, T, E, H, W)

    assert out.shape == (B, T, emb_dim, H, W), out.shape
    assert out.dtype == jnp.float32
    assert jnp.allclose(out, ref, atol=1e-5, rtol=1e-5)

    print("KERNEL_OK")
</pallas_src>

<mosaic_0001>
module attributes {stable_mosaic.version = 11 : i64} {
  func.func @_state_embed_kernel(%arg0: i32, %arg1: i32, %arg2: memref<3x4x64xi32, #tpu.memory_space<vmem>>, %arg3: memref<32x16xf32, #tpu.memory_space<vmem>>, %arg4: memref<3x32x64xf32, #tpu.memory_space<vmem>>) attributes {dimension_semantics = [#tpu.dimension_semantics<parallel>, #tpu.dimension_semantics<parallel>], iteration_bounds = array<i64: 2, 1>, scalar_prefetch = 0 : i64, scratch_operands = 0 : i64, tpu.core_type = #tpu.core_type<tc>, window_params = [{transform_indices = @transform_0, window_bounds = array<i64: 3, 4, 64>}, {pipeline_mode = #tpu.pipeline_mode<synchronous>, transform_indices = @transform_1, window_bounds = array<i64: 32, 16>}, {transform_indices = @transform_2, window_bounds = array<i64: 3, 32, 64>}]} {
    %c0 = arith.constant 0 : index
    %c0_0 = arith.constant 0 : index
    %0 = vector.load %arg3[%c0, %c0_0] : memref<32x16xf32, #tpu.memory_space<vmem>>, vector<32x16xf32>
    %1 = tpu.iota {dimensions = array<i32: 0>} : vector<16x64xi32>
    %c0_1 = arith.constant 0 : index
    %c0_2 = arith.constant 0 : index
    %c0_3 = arith.constant 0 : index
    %2 = vector.load %arg2[%c0_1, %c0_2, %c0_3] : memref<3x4x64xi32, #tpu.memory_space<vmem>>, vector<1x4x64xi32>
    %3 = vector.shape_cast %2 : vector<1x4x64xi32> to vector<4x64xi32>
    %c0_i32 = arith.constant 0 : i32
    %4 = vector.broadcast %c0_i32 : i32 to vector<16x64xi32>
    %5 = vector.extract_strided_slice %3 {offsets = [0, 0], sizes = [1, 64], strides = [1, 1]} : vector<4x64xi32> to vector<1x64xi32>
    %6 = vector.shape_cast %5 : vector<1x64xi32> to vector<64xi32>
    %7 = vector.shape_cast %6 : vector<64xi32> to vector<1x64xi32>
    %8 = vector.broadcast %7 : vector<1x64xi32> to vector<16x64xi32>
    %9 = arith.cmpi eq, %8, %1 : vector<16x64xi32>
    %10 = arith.extui %9 : vector<16x64xi1> to vector<16x64xi32>
    %11 = arith.addi %4, %10 : vector<16x64xi32>
    %12 = vector.extract_strided_slice %3 {offsets = [1, 0], sizes = [1, 64], strides = [1, 1]} : vector<4x64xi32> to vector<1x64xi32>
    %13 = vector.shape_cast %12 : vector<1x64xi32> to vector<64xi32>
    %14 = vector.shape_cast %13 : vector<64xi32> to vector<1x64xi32>
    %15 = vector.broadcast %14 : vector<1x64xi32> to vector<16x64xi32>
    %16 = arith.cmpi eq, %15, %1 : vector<16x64xi32>
    %17 = arith.extui %16 : vector<16x64xi1> to vector<16x64xi32>
    %18 = arith.addi %11, %17 : vector<16x64xi32>
    %19 = vector.extract_strided_slice %3 {offsets = [2, 0], sizes = [1, 64], strides = [1, 1]} : vector<4x64xi32> to vector<1x64xi32>
    %20 = vector.shape_cast %19 : vector<1x64xi32> to vector<64xi32>
    %21 = vector.shape_cast %20 : vector<64xi32> to vector<1x64xi32>
    %22 = vector.broadcast %21 : vector<1x64xi32> to vector<16x64xi32>
    %23 = arith.cmpi eq, %22, %1 : vector<16x64xi32>
    %24 = arith.extui %23 : vector<16x64xi1> to vector<16x64xi32>
    %25 = arith.addi %18, %24 : vector<16x64xi32>
    %26 = vector.extract_strided_slice %3 {offsets = [3, 0], sizes = [1, 64], strides = [1, 1]} : vector<4x64xi32> to vector<1x64xi32>
    %27 = vector.shape_cast %26 : vector<1x64xi32> to vector<64xi32>
    %28 = vector.shape_cast %27 : vector<64xi32> to vector<1x64xi32>
    %29 = vector.broadcast %28 : vector<1x64xi32> to vector<16x64xi32>
    %30 = arith.cmpi eq, %29, %1 : vector<16x64xi32>
    %31 = arith.extui %30 : vector<16x64xi1> to vector<16x64xi32>
    %32 = arith.addi %25, %31 : vector<16x64xi32>
    %33 = arith.sitofp %32 : vector<16x64xi32> to vector<16x64xf32>
    %cst = arith.constant dense<0.000000e+00> : vector<32x64xf32>
    %34 = tpu.matmul %0, %33, %cst {dimension_numbers = #tpu.dot_dimension_numbers<[1], [0], [0], [1], [0, 0, 1, 1], [], []>} : vector<32x16xf32>, vector<16x64xf32>, vector<32x64xf32> -> vector<32x64xf32>
    %c0_4 = arith.constant 0 : index
    %c0_5 = arith.constant 0 : index
    %c0_6 = arith.constant 0 : index
    %35 = vector.load %arg4[%c0_4, %c0_5, %c0_6] : memref<3x32x64xf32, #tpu.memory_space<vmem>>, vector<1x32x64xf32>
    %36 = vector.shape_cast %35 : vector<1x32x64xf32> to vector<32x64xf32>
    %37 = vector.shape_cast %34 : vector<32x64xf32> to vector<1x32x64xf32>
    tpu.vector_store %arg4[%c0_4, %c0_5, %c0_6], %37 {strides = array<i32>} : memref<3x32x64xf32, #tpu.memory_space<vmem>>, vector<1x32x64xf32>,
    %c1 = arith.constant 1 : index
    %c0_7 = arith.constant 0 : index
    %c0_8 = arith.constant 0 : index
    %38 = vector.load %arg2[%c1, %c0_7, %c0_8] : memref<3x4x64xi32, #tpu.memory_space<vmem>>, vector<1x4x64xi32>
    %39 = vector.shape_cast %38 : vector<1x4x64xi32> to vector<4x64xi32>
    %c0_i32_9 = arith.constant 0 : i32
    %40 = vector.broadcast %c0_i32_9 : i32 to vector<16x64xi32>
    %41 = vector.extract_strided_slice %39 {offsets = [0, 0], sizes = [1, 64], strides = [1, 1]} : vector<4x64xi32> to vector<1x64xi32>
    %42 = vector.shape_cast %41 : vector<1x64xi32> to vector<64xi32>
    %43 = vector.shape_cast %42 : vector<64xi32> to vector<1x64xi32>
    %44 = vector.broadcast %43 : vector<1x64xi32> to vector<16x64xi32>
    %45 = arith.cmpi eq, %44, %1 : vector<16x64xi32>
    %46 = arith.extui %45 : vector<16x64xi1> to vector<16x64xi32>
    %47 = arith.addi %40, %46 : vector<16x64xi32>
    %48 = vector.extract_strided_slice %39 {offsets = [1, 0], sizes = [1, 64], strides = [1, 1]} : vector<4x64xi32> to vector<1x64xi32>
    %49 = vector.shape_cast %48 : vector<1x64xi32> to vector<64xi32>
    %50 = vector.shape_cast %49 : vector<64xi32> to vector<1x64xi32>
    %51 = vector.broadcast %50 : vector<1x64xi32> to vector<16x64xi32>
    %52 = arith.cmpi eq, %51, %1 : vector<16x64xi32>
    %53 = arith.extui %52 : vector<16x64xi1> to vector<16x64xi32>
    %54 = arith.addi %47, %53 : vector<16x64xi32>
    %55 = vector.extract_strided_slice %39 {offsets = [2, 0], sizes = [1, 64], strides = [1, 1]} : vector<4x64xi32> to vector<1x64xi32>
    %56 = vector.shape_cast %55 : vector<1x64xi32> to vector<64xi32>
    %57 = vector.shape_cast %56 : vector<64xi32> to vector<1x64xi32>
    %58 = vector.broadcast %57 : vector<1x64xi32> to vector<16x64xi32>
    %59 = arith.cmpi eq, %58, %1 : vector<16x64xi32>
    %60 = arith.extui %59 : vector<16x64xi1> to vector<16x64xi32>
    %61 = arith.addi %54, %60 : vector<16x64xi32>
    %62 = vector.extract_strided_slice %39 {offsets = [3, 0], sizes = [1, 64], strides = [1, 1]} : vector<4x64xi32> to vector<1x64xi32>
    %63 = vector.shape_cast %62 : vector<1x64xi32> to vector<64xi32>
    %64 = vector.shape_cast %63 : vector<64xi32> to vector<1x64xi32>
    %65 = vector.broadcast %64 : vector<1x64xi32> to vector<16x64xi32>
    %66 = arith.cmpi eq, %65, %1 : vector<16x64xi32>
    %67 = arith.extui %66 : vector<16x64xi1> to vector<16x64xi32>
    %68 = arith.addi %61, %67 : vector<16x64xi32>
    %69 = arith.sitofp %68 : vector<16x64xi32> to vector<16x64xf32>
    %cst_10 = arith.constant dense<0.000000e+00> : vector<32x64xf32>
    %70 = tpu.matmul %0, %69, %cst_10 {dimension_numbers = #tpu.dot_dimension_numbers<[1], [0], [0], [1], [0, 0, 1, 1], [], []>} : vector<32x16xf32>, vector<16x64xf32>, vector<32x64xf32> -> vector<32x64xf32>
    %c1_11 = arith.constant 1 : index
    %c0_12 = arith.constant 0 : index
    %c0_13 = arith.constant 0 : index
    %71 = vector.load %arg4[%c1_11, %c0_12, %c0_13] : memref<3x32x64xf32, #tpu.memory_space<vmem>>, vector<1x32x64xf32>
    %72 = vector.shape_cast %71 : vector<1x32x64xf32> to vector<32x64xf32>
    %73 = vector.shape_cast %70 : vector<32x64xf32> to vector<1x32x64xf32>
    tpu.vector_store %arg4[%c1_11, %c0_12, %c0_13], %73 {strides = array<i32>} : memref<3x32x64xf32, #tpu.memory_space<vmem>>, vector<1x32x64xf32>,
    %c2 = arith.constant 2 : index
    %c0_14 = arith.constant 0 : index
    %c0_15 = arith.constant 0 : index
    %74 = vector.load %arg2[%c2, %c0_14, %c0_15] : memref<3x4x64xi32, #tpu.memory_space<vmem>>, vector<1x4x64xi32>
    %75 = vector.shape_cast %74 : vector<1x4x64xi32> to vector<4x64xi32>
    %c0_i32_16 = arith.constant 0 : i32
    %76 = vector.broadcast %c0_i32_16 : i32 to vector<16x64xi32>
    %77 = vector.extract_strided_slice %75 {offsets = [0, 0], sizes = [1, 64], strides = [1, 1]} : vector<4x64xi32> to vector<1x64xi32>
    %78 = vector.shape_cast %77 : vector<1x64xi32> to vector<64xi32>
    %79 = vector.shape_cast %78 : vector<64xi32> to vector<1x64xi32>
    %80 = vector.broadcast %79 : vector<1x64xi32> to vector<16x64xi32>
    %81 = arith.cmpi eq, %80, %1 : vector<16x64xi32>
    %82 = arith.extui %81 : vector<16x64xi1> to vector<16x64xi32>
    %83 = arith.addi %76, %82 : vector<16x64xi32>
    %84 = vector.extract_strided_slice %75 {offsets = [1, 0], sizes = [1, 64], strides = [1, 1]} : vector<4x64xi32> to vector<1x64xi32>
    %85 = vector.shape_cast %84 : vector<1x64xi32> to vector<64xi32>
    %86 = vector.shape_cast %85 : vector<64xi32> to vector<1x64xi32>
    %87 = vector.broadcast %86 : vector<1x64xi32> to vector<16x64xi32>
    %88 = arith.cmpi eq, %87, %1 : vector<16x64xi32>
    %89 = arith.extui %88 : vector<16x64xi1> to vector<16x64xi32>
    %90 = arith.addi %83, %89 : vector<16x64xi32>
    %91 = vector.extract_strided_slice %75 {offsets = [2, 0], sizes = [1, 64], strides = [1, 1]} : vector<4x64xi32> to vector<1x64xi32>
    %92 = vector.shape_cast %91 : vector<1x64xi32> to vector<64xi32>
    %93 = vector.shape_cast %92 : vector<64xi32> to vector<1x64xi32>
    %94 = vector.broadcast %93 : vector<1x64xi32> to vector<16x64xi32>
    %95 = arith.cmpi eq, %94, %1 : vector<16x64xi32>
    %96 = arith.extui %95 : vector<16x64xi1> to vector<16x64xi32>
    %97 = arith.addi %90, %96 : vector<16x64xi32>
    %98 = vector.extract_strided_slice %75 {offsets = [3, 0], sizes = [1, 64], strides = [1, 1]} : vector<4x64xi32> to vector<1x64xi32>
    %99 = vector.shape_cast %98 : vector<1x64xi32> to vector<64xi32>
    %100 = vector.shape_cast %99 : vector<64xi32> to vector<1x64xi32>
    %101 = vector.broadcast %100 : vector<1x64xi32> to vector<16x64xi32>
    %102 = arith.cmpi eq, %101, %1 : vector<16x64xi32>
    %103 = arith.extui %102 : vector<16x64xi1> to vector<16x64xi32>
    %104 = arith.addi %97, %103 : vector<16x64xi32>
    %105 = arith.sitofp %104 : vector<16x64xi32> to vector<16x64xf32>
    %cst_17 = arith.constant dense<0.000000e+00> : vector<32x64xf32>
    %106 = tpu.matmul %0, %105, %cst_17 {dimension_numbers = #tpu.dot_dimension_numbers<[1], [0], [0], [1], [0, 0, 1, 1], [], []>} : vector<32x16xf32>, vector<16x64xf32>, vector<32x64xf32> -> vector<32x64xf32>
    %c2_18 = arith.constant 2 : index
    %c0_19 = arith.constant 0 : index
    %c0_20 = arith.constant 0 : index
    %107 = vector.load %arg4[%c2_18, %c0_19, %c0_20] : memref<3x32x64xf32, #tpu.memory_space<vmem>>, vector<1x32x64xf32>
    %108 = vector.shape_cast %107 : vector<1x32x64xf32> to vector<32x64xf32>
    %109 = vector.shape_cast %106 : vector<32x64xf32> to vector<1x32x64xf32>
    tpu.vector_store %arg4[%c2_18, %c0_19, %c0_20], %109 {strides = array<i32>} : memref<3x32x64xf32, #tpu.memory_space<vmem>>, vector<1x32x64xf32>,
    return
  }
  func.func @transform_0(%arg0: i32, %arg1: i32) -> (i32, i32, i32) {
    %c0_i32 = arith.constant 0 : i32
    %c0_i32_0 = arith.constant 0 : i32
    return %arg0, %c0_i32, %arg1 : i32, i32, i32
  }
  func.func @transform_1(%arg0: i32, %arg1: i32) -> (i32, i32) {
    %c0_i32 = arith.constant 0 : i32
    %c0_i32_0 = arith.constant 0 : i32
    %c0_i32_1 = arith.constant 0 : i32
    return %c0_i32, %c0_i32_0 : i32, i32
  }
  func.func @transform_2(%arg0: i32, %arg1: i32) -> (i32, i32, i32) {
    %c0_i32 = arith.constant 0 : i32
    %c0_i32_0 = arith.constant 0 : i32
    return %arg0, %c0_i32, %arg1 : i32, i32, i32
  }
}

</mosaic_0001>

<llo_original>
// kernel: state_embedder_forward.1
$region0: #{state_embedder_forward.1}
  #allocation0 [shape = 'u32[]', space=smem, size = 0x4, offset = 0x4, fixed_abs, tag = 'smem constant byte address 0x4 - core index']
  #allocation1 [shape = 'u32[144,128]{1,0:T(1,128)}', space=vmem, size = 0x12000, scoped, tag = 'internal scratch']
  %s0 = inlined_call_operand.vmem [shape: s32[6,4,64], index: 0, kind: input, shape index: {}]
  %s1 = inlined_call_operand.vmem [shape: f32[32,16], index: 1, kind: input, shape index: {}]
  %s2 = inlined_call_operand.vmem [shape: f32[6,32,64], index: 2, kind: output, shape index: {}]
  %s3 = sld [smem:[#allocation0]]
  $region41: #{state_embedder_forward.1} parent=0
    _
  %s5 = ssub.s32 1, %s3
  %s6 = scalar_select 0, %s5, %s3
  loop: start=0, step=1, limit=4
  $region2: #{state_embedder_forward.1} parent=0 // loop_pre_header
    _
  $region3: #{state_embedder_forward.1} parent=0 // loop_header
    %s8 = sphi 0, %s12
    %p9 = scmp.ge.s32.totalorder %s8, 4
    %s15 = sphi 0, %s27
    %s16 = sphi 0, %s23
    %s17 = sphi 0, %s15
    %s18 = sphi 0, %s16
    %s19 = sphi 0, %s17
    %s20 = sphi 0, %s18
    %s32 = sphi 0, %s34
    %s35 = sphi 0, %s32
    %s36 = sphi 0, %s35
    %s52 = sphi 0, %s36
    %s56 = sphi 0, %s56
    %s58 = sphi 0, %s56
    %s59 = sphi 0, %s58
    %s73 = sphi 0, %s59
    %s81 = sphi 0, %s83
    %s84 = sphi 0, %s81
    %s85 = sphi 0, %s84
    %s101 = sphi 0, %s85
  $region4: #{state_embedder_forward.1} parent=0 // loop_header_branch
    %11 = sbr.rel (%p9) target = $region8
  $region5: #{state_embedder_forward.1} parent=0 // loop_body
    %s13 = ssub.s32 %s8, 1
    %s14 = ssub.s32 %s8, 2
    %s21 = sadd.s32 1, %s16
    %p22 = scmp.ge.s32.totalorder %s21, 1
    %s23 = scalar_select %p22, 0, %s21
    %s24 = sadd.s32 1, %s15
    %s25 = scalar_select %p22, %s24, %s15
    %p26 = scmp.ge.s32.totalorder %s25, 2
    %s27 = scalar_select %p26, 0, %s25
    %s28 = ssub.s32 %s15, %s27
    %s29 = ssub.s32 %s16, %s23
    %s30 = sor.u32 %s28, %s29
    %p31 = scmp.eq.s32.totalorder %s30, 0
    %s33 = sadd.s32 %s32, 1
    %s34 = scalar_select %p31, %s32, %s33
    %p37 = pneg %p31
    %p38 = scmp.eq.s32.totalorder %s8, 1
    %p39 = por %p37, %p38
    %p40 = scmp.ne.s32.totalorder %s32, %s35
    %p41 = scmp.eq.s32.totalorder %s8, 0
    %p42 = por %p40, %p41
    %p43 = scmp.ne.s32.totalorder %s32, %s35
    %p44 = scmp.eq.s32.totalorder %s13, 1
    %p45 = por %p43, %p44
    %p46 = scmp.ne.s32.totalorder %s35, %s36
    %p47 = scmp.eq.s32.totalorder %s13, 0
    %p48 = por %p46, %p47
    %p49 = scmp.ne.s32.totalorder %s35, %s36
    %p50 = scmp.eq.s32.totalorder %s14, 1
    %p51 = por %p49, %p50
    %p53 = scmp.ne.s32.totalorder %s36, %s52
    %p54 = scmp.eq.s32.totalorder %s14, 0
    %p55 = por %p53, %p54
    %s57 = sadd.s32 %s56, 1
    %p60 = scmp.eq.s32.totalorder %s8, 1
    %p61 = scmp.ne.s32.totalorder %s56, %s58
    %p62 = scmp.eq.s32.totalorder %s8, 0
    %p63 = por %p61, %p62
    %p64 = scmp.ne.s32.totalorder %s56, %s58
    %p65 = scmp.eq.s32.totalorder %s13, 1
    %p66 = por %p64, %p65
    %p67 = scmp.ne.s32.totalorder %s58, %s59
    %p68 = scmp.eq.s32.totalorder %s13, 0
    %p69 = por %p67, %p68
    %p70 = scmp.ne.s32.totalorder %s58, %s59
    %p71 = scmp.eq.s32.totalorder %s14, 1
    %p72 = por %p70, %p71
    %p74 = scmp.ne.s32.totalorder %s59, %s73
    %p75 = scmp.eq.s32.totalorder %s14, 0
    %p76 = por %p74, %p75
    %s77 = ssub.s32 %s15, %s27
    %s78 = ssub.s32 %s16, %s23
    %s79 = sor.u32 %s77, %s78
    %p80 = scmp.eq.s32.totalorder %s79, 0
    %s82 = sadd.s32 %s81, 1
    %s83 = scalar_select %p80, %s81, %s82
    %p86 = pneg %p80
    %p87 = scmp.eq.s32.totalorder %s8, 1
    %p88 = por %p86, %p87
    %p89 = scmp.ne.s32.totalorder %s81, %s84
    %p90 = scmp.eq.s32.totalorder %s8, 0
    %p91 = por %p89, %p90
    %p92 = scmp.ne.s32.totalorder %s81, %s84
    %p93 = scmp.eq.s32.totalorder %s13, 1
    %p94 = por %p92, %p93
    %p95 = scmp.ne.s32.totalorder %s84, %s85
    %p96 = scmp.eq.s32.totalorder %s13, 0
    %p97 = por %p95, %p96
    %p98 = scmp.ne.s32.totalorder %s84, %s85
    %p99 = scmp.eq.s32.totalorder %s14, 1
    %p100 = por %p98, %p99
    %p102 = scmp.ne.s32.totalorder %s85, %s101
    %p103 = scmp.eq.s32.totalorder %s14, 0
    %p104 = por %p102, %p103
    %p105 = scmp.le.s32.totalorder 1, %s8
    %p106 = scmp.lt.s32.totalorder %s8, 3
    %p107 = pnand %p105, %p106
    %p108 = pneg %p107
    // Predicated region
    $region9: #{state_embedder_forward.1} parent=5 // pred_check
      _
    $region10: #{state_embedder_forward.1} parent=5 // pred_check_branch
      %110 = sbr.rel (%p107) target = $region12
    $region11: #{state_embedder_forward.1} parent=5 // pred_region
      %s111 = ssub.s32 %s8, 1
      // Predicated region
      $region13: #{state_embedder_forward.1} parent=11 // pred_check
        %p112 = pneg %p69
      $region14: #{state_embedder_forward.1} parent=11 // pred_check_branch
        %114 = sbr.rel (%p112) target = $region16
      $region15: #{state_embedder_forward.1} parent=11 // pred_region
        _
      $region16: #{state_embedder_forward.1} parent=11 // pred_fallthru
        _
    $region12: #{state_embedder_forward.1} parent=5 // pred_fallthru
      _
    %p115 = scmp.lt.s32.totalorder %s8, 2
    // Predicated region
    $region17: #{state_embedder_forward.1} parent=5 // pred_check
      %p116 = pneg %p115
    $region18: #{state_embedder_forward.1} parent=5 // pred_check_branch
      %118 = sbr.rel (%p116) target = $region20
    $region19: #{state_embedder_forward.1} parent=5 // pred_region
      // Predicated region
      $region21: #{state_embedder_forward.1} parent=19 // pred_check
        %p119 = pneg %p42
      $region22: #{state_embedder_forward.1} parent=19 // pred_check_branch
        %121 = sbr.rel (%p119) target = $region24
      $region23: #{state_embedder_forward.1} parent=19 // pred_region
        %s122 = smul.u32 3, %s15
        %p123 = scmp.lt.s32.totalorder %s122, 5
        %s124 = scalar_select %p123, %s122, 5
        %p125 = scmp.lt.s32.totalorder %s16, 0
        %s126 = scalar_select %p125, %s16, 0
        %s127 = sadd.s32 %s126, %s124
        %s128 = smul.addr %s127, 4
        %s129 = scalar_lea.vmem %s0, %s128
        %s130 = smul.u32 3, %s15
      $region24: #{state_embedder_forward.1} parent=19 // pred_fallthru
        _
    $region20: #{state_embedder_forward.1} parent=5 // pred_fallthru
      _
    %p131 = scmp.le.s32.totalorder 1, %s8
    %p132 = scmp.lt.s32.totalorder %s8, 3
    %p133 = pnand %p131, %p132
    %p134 = pneg %p133
    // Predicated region
    $region25: #{state_embedder_forward.1} parent=5 // pred_check
      _
    $region26: #{state_embedder_forward.1} parent=5 // pred_check_branch
      %136 = sbr.rel (%p133) target = $region28
    $region27: #{state_embedder_forward.1} parent=5 // pred_region
      %s137 = ssub.s32 %s8, 1
      %s138 = smul.u32 3, %s17
      %p139 = scmp.lt.s32.totalorder %s138, 5
      %s140 = scalar_select %p139, %s138, 5
      %p141 = scmp.lt.s32.totalorder %s18, 0
      %s142 = scalar_select %p141, %s18, 0
      %s143 = sadd.s32 %s142, %s140
      %s144 = smul.addr %s143, 4
      %s145 = scalar_lea.vmem %s0, %s144
      %p146 = pneg %p48
      %p147 = pneg %p45
      %p148 = pneg %p69
      %p149 = pneg %p66
      %p150 = pneg %p97
      %p151 = pneg %p94
      %s152 = smul.u32 3, %s17
      %p153 = scmp.lt.s32.totalorder %s152, 5
      %s154 = scalar_select %p153, %s152, 5
      %p155 = scmp.lt.s32.totalorder %s18, 0
      %s156 = scalar_select %p155, %s18, 0
      %s157 = smul.addr %s154, 4
      %s158 = sadd.s32 %s156, %s157
      %s159 = smul.addr %s158, 8
      %s160 = scalar_lea.vmem %s2, %s159
      %s161 = smul.u32 3, %s17
      %p162 = scmp.lt.s32.totalorder %s161, 5
      %s163 = scalar_select %p162, %s161, 5
      %p164 = scmp.lt.s32.totalorder %s18, 0
      %s165 = scalar_select %p164, %s18, 0
      %s166 = sadd.s32 %s165, %s163
      %s167 = smul.addr %s166, 4
      %s168 = scalar_lea.vmem %s0, %s167
      %s169 = smul.u32 3, %s17
      %s170 = smul.u32 3, %s17
      %p171 = scmp.lt.s32.totalorder %s170, 5
      %s172 = scalar_select %p171, %s170, 5
      %p173 = scmp.lt.s32.totalorder %s18, 0
      %s174 = scalar_select %p173, %s18, 0
      %s175 = smul.addr %s172, 4
      %s176 = sadd.s32 %s174, %s175
      %s177 = smul.addr %s176, 8
      %s178 = scalar_lea.vmem %s2, %s177
      %s179 = smul.u32 3, %s17
      %v180 = vld [vmem:[%s1] sm:$0xff]
      %v181 = vld [vmem:[%s1 + $0x8] sm:$0xff]
      %v182 = vld [vmem:[%s1 + $0x10] sm:$0xff]
      %v183 = vld [vmem:[%s1 + $0x18] sm:$0xff]
      %v184 = vlaneseq
      %v185 = vshrl.u32 %v184, 7
      %v186 = vadd.s32 %v185, 8
      %v187 = vld [vmem:[%s168] sm:$0xf]
      %v188 = vlaneseq
      %v189 = vshrl.u32 %v188, 7
      %v190 = vsub.s32 0, %v189
      %v191 = vrot.slane %v187, %v190
      %vm192 = vcmp.eq.s32.totalorder %v191, %v185
      %vm193 = vcmp.eq.s32.totalorder %v191, %v186
      %v194 = vsel %vm192, 1, 0
      %v195 = vsel %vm193, 1, 0
      %v196 = vlaneseq
      %v197 = vshrl.u32 %v196, 7
      %v198 = vsub.s32 1, %v197
      %v199 = vrot.slane %v187, %v198
      %vm200 = vcmp.eq.s32.totalorder %v199, %v185
      %vm201 = vcmp.eq.s32.totalorder %v199, %v186
      %v202 = vsel %vm200, 1, 0
      %v203 = vsel %vm201, 1, 0
      %v204 = vadd.s32 %v194, %v202
      %v205 = vadd.s32 %v195, %v203
      %v206 = vlaneseq
      %v207 = vshrl.u32 %v206, 7
      %v208 = vsub.s32 2, %v207
      %v209 = vrot.slane %v187, %v208
      %vm210 = vcmp.eq.s32.totalorder %v209, %v185
      %vm211 = vcmp.eq.s32.totalorder %v209, %v186
      %v212 = vsel %vm210, 1, 0
      %v213 = vsel %vm211, 1, 0
      %v214 = vadd.s32 %v204, %v212
      %v215 = vadd.s32 %v205, %v213
      %v216 = vlaneseq
      %v217 = vshrl.u32 %v216, 7
      %v218 = vsub.s32 3, %v217
      %v219 = vrot.slane %v187, %v218
      %vm220 = vcmp.eq.s32.totalorder %v219, %v185
      %vm221 = vcmp.eq.s32.totalorder %v219, %v186
      %v222 = vsel %vm220, 1, 0
      %v223 = vsel %vm221, 1, 0
      %v224 = vadd.s32 %v214, %v222
      %v225 = vadd.s32 %v215, %v223
      %v226 = vcvt.s32.f32 %v224
      %v227 = vcvt.s32.f32 %v225
      %vm228 = vcmask 130048
      %v230 = vsel %vm228, %v180, 0
      %v233 = vsel %vm228, %v181, 0
      %v236 = vsel %vm228, %v182, 0
      %v239 = vsel %vm228, %v183, 0
      %241 = vmatprep.subr.mxu0 0.0
      %242 = vmatpush1.msra.mxu0 0.0
      %243 = vmatprep.subr.mxu0 0.0
      %244 = vmatpush1.msra.mxu0 0.0
      %245 = vmatprep.subr.mxu0 0.0
      %246 = vmatpush1.msra.mxu0 0.0
      %247 = vmatprep.subr.mxu0 0.0
      %248 = vmatpush1.msra.mxu0 0.0
      %249 = vmatprep.subr.mxu0 0.0
      %250 = vmatpush1.msra.mxu0 0.0
      %251 = vmatprep.subr.mxu0 0.0
      %252 = vmatpush1.msra.mxu0 0.0
      %253 = vmatprep.subr.mxu0 0.0
      %254 = vmatpush1.msra.mxu0 0.0
      %255 = vmatprep.subr.mxu0 0.0
      %256 = vmatpush1.msra.mxu0 0.0
      %257 = vmatprep.subr.mxu0 0.0
      %258 = vmatpush1.msra.mxu0 0.0
      %259 = vmatprep.subr.mxu0 0.0
      %260 = vmatpush1.msra.mxu0 0.0
      %261 = vmatprep.subr.mxu0 0.0
      %262 = vmatpush1.msra.mxu0 0.0
      %263 = vmatprep.subr.mxu0 0.0
      %264 = vmatpush1.msra.mxu0 0.0
      %265 = vmatprep.subr.mxu0 0.0
      %266 = vmatpush1.msra.mxu0 0.0
      %267 = vmatprep.subr.mxu0 0.0
      %268 = vmatpush1.msra.mxu0 0.0
      %269 = vmatprep.subr.mxu0 0.0
      %270 = vmatpush1.msra.mxu0 %v227
      %271 = vmatprep.subr.mxu0 0.0
      %272 = vmatpush1.msra.mxu0 %v226
      %273 = vmatprep.subr.mxu0 0.0
      %274 = vmatpush2.msra.mxu0 0.0
      %275 = vmatprep.subr.mxu0 0.0
      %276 = vmatpush2.msra.mxu0 0.0
      %277 = vmatprep.subr.mxu0 0.0
      %278 = vmatpush2.msra.mxu0 0.0
      %279 = vmatprep.subr.mxu0 0.0
      %280 = vmatpush2.msra.mxu0 0.0
      %281 = vmatprep.subr.mxu0 0.0
      %282 = vmatpush2.msra.mxu0 0.0
      %283 = vmatprep.subr.mxu0 0.0
      %284 = vmatpush2.msra.mxu0 0.0
      %285 = vmatprep.subr.mxu0 0.0
      %286 = vmatpush2.msra.mxu0 0.0
      %287 = vmatprep.subr.mxu0 0.0
      %288 = vmatpush2.msra.mxu0 0.0
      %289 = vmatprep.subr.mxu0 0.0
      %290 = vmatpush2.msra.mxu0 0.0
      %291 = vmatprep.subr.mxu0 0.0
      %292 = vmatpush2.msra.mxu0 0.0
      %293 = vmatprep.subr.mxu0 0.0
      %294 = vmatpush2.msra.mxu0 0.0
      %295 = vmatprep.subr.mxu0 0.0
      %296 = vmatpush2.msra.mxu0 0.0
      %297 = vmatprep.subr.mxu0 0.0
      %298 = vmatpush2.msra.mxu0 0.0
      %299 = vmatprep.subr.mxu0 0.0
      %300 = vmatpush2.msra.mxu0 0.0
      %301 = vmatprep.subr.mxu0 0.0
      %302 = vmatpush2.msra.mxu0 0.0
      %303 = vmatprep.subr.mxu0 0.0
      %304 = vmatpush2.msra.mxu0 0.0
      %305 = vmatprep.mubr.f32.mxu0 0.0
      %306 = vmatmul.mubr.f32.gmra.mxu0 %v230
      %v307 = vpop.f32.mrf.mxu0
      %v308 = vadd.f32 0.0, %v307
      %v309 = vpop.f32.mrf.mxu0
      %310 = vmatprep.mubr.f32.mxu0 0.0
      %311 = vmatmul.mubr.f32.gmra.mxu0 %v233
      %v312 = vpop.f32.mrf.mxu0
      %v313 = vadd.f32 0.0, %v312
      %v314 = vpop.f32.mrf.mxu0
      %315 = vmatprep.mubr.f32.mxu0 0.0
      %316 = vmatmul.mubr.f32.gmra.mxu0 %v236
      %v317 = vpop.f32.mrf.mxu0
      %v318 = vadd.f32 0.0, %v317
      %v319 = vpop.f32.mrf.mxu0
      %320 = vmatprep.mubr.f32.mxu0 0.0
      %321 = vmatmul.mubr.f32.gmra.mxu0 %v239
      %v322 = vpop.f32.mrf.mxu0
      %v323 = vadd.f32 0.0, %v322
      %v324 = vpop.f32.mrf.mxu0
      %325 = vdwg.mxu0
      %vm326 = vcmask 523264
      %327 = vst.msk [vmem:[%s178] sm:$0xff] %vm326, %v308
      %328 = vst.msk [vmem:[%s178 + $0x8] sm:$0xff] %vm326, %v313
      %329 = vst.msk [vmem:[%s178 + $0x10] sm:$0xff] %vm326, %v318
      %330 = vst.msk [vmem:[%s178 + $0x18] sm:$0xff] %vm326, %v323
      %s331 = scalar_lea.vmem %s168, 4
      %v332 = vld [vmem:[%s331] sm:$0xf]
      %v333 = vlaneseq
      %v334 = vshrl.u32 %v333, 7
      %v335 = vsub.s32 0, %v334
      %v336 = vrot.slane %v332, %v335
      %vm337 = vcmp.eq.s32.totalorder %v336, %v185
      %vm338 = vcmp.eq.s32.totalorder %v336, %v186
      %v339 = vsel %vm337, 1, 0
      %v340 = vsel %vm338, 1, 0
      %v341 = vlaneseq
      %v342 = vshrl.u32 %v341, 7
      %v343 = vsub.s32 1, %v342
      %v344 = vrot.slane %v332, %v343
      %vm345 = vcmp.eq.s32.totalorder %v344, %v185
      %vm346 = vcmp.eq.s32.totalorder %v344, %v186
      %v347 = vsel %vm345, 1, 0
      %v348 = vsel %vm346, 1, 0
      %v349 = vadd.s32 %v339, %v347
      %v350 = vadd.s32 %v340, %v348
      %v351 = vlaneseq
      %v352 = vshrl.u32 %v351, 7
      %v353 = vsub.s32 2, %v352
      %v354 = vrot.slane %v332, %v353
      %vm355 = vcmp.eq.s32.totalorder %v354, %v185
      %vm356 = vcmp.eq.s32.totalorder %v354, %v186
      %v357 = vsel %vm355, 1, 0
      %v358 = vsel %vm356, 1, 0
      %v359 = vadd.s32 %v349, %v357
      %v360 = vadd.s32 %v350, %v358
      %v361 = vlaneseq
      %v362 = vshrl.u32 %v361, 7
      %v363 = vsub.s32 3, %v362
      %v364 = vrot.slane %v332, %v363
      %vm365 = vcmp.eq.s32.totalorder %v364, %v185
      %vm366 = vcmp.eq.s32.totalorder %v364, %v186
      %v367 = vsel %vm365, 1, 0
      %v368 = vsel %vm366, 1, 0
      %v369 = vadd.s32 %v359, %v367
      %v370 = vadd.s32 %v360, %v368
      %v371 = vcvt.s32.f32 %v369
      %v372 = vcvt.s32.f32 %v370
      %373 = vmatprep.subr.mxu0 0.0
      %374 = vmatpush1.msra.mxu0 0.0
      %375 = vmatprep.subr.mxu0 0.0
      %376 = vmatpush1.msra.mxu0 0.0
      %377 = vmatprep.subr.mxu0 0.0
      %378 = vmatpush1.msra.mxu0 0.0
      %379 = vmatprep.subr.mxu0 0.0
      %380 = vmatpush1.msra.mxu0 0.0
      %381 = vmatprep.subr.mxu0 0.0
      %382 = vmatpush1.msra.mxu0 0.0
      %383 = vmatprep.subr.mxu0 0.0
      %384 = vmatpush1.msra.mxu0 0.0
      %385 = vmatprep.subr.mxu0 0.0
      %386 = vmatpush1.msra.mxu0 0.0
      %387 = vmatprep.subr.mxu0 0.0
      %388 = vmatpush1.msra.mxu0 0.0
      %389 = vmatprep.subr.mxu0 0.0
      %390 = vmatpush1.msra.mxu0 0.0
      %391 = vmatprep.subr.mxu0 0.0
      %392 = vmatpush1.msra.mxu0 0.0
      %393 = vmatprep.subr.mxu0 0.0
      %394 = vmatpush1.msra.mxu0 0.0
      %395 = vmatprep.subr.mxu0 0.0
      %396 = vmatpush1.msra.mxu0 0.0
      %397 = vmatprep.subr.mxu0 0.0
      %398 = vmatpush1.msra.mxu0 0.0
      %399 = vmatprep.subr.mxu0 0.0
      %400 = vmatpush1.msra.mxu0 0.0
      %401 = vmatprep.subr.mxu0 0.0
      %402 = vmatpush1.msra.mxu0 %v372
      %403 = vmatprep.subr.mxu0 0.0
      %404 = vmatpush1.msra.mxu0 %v371
      %405 = vmatprep.subr.mxu0 0.0
      %406 = vmatpush2.msra.mxu0 0.0
      %407 = vmatprep.subr.mxu0 0.0
      %408 = vmatpush2.msra.mxu0 0.0
      %409 = vmatprep.subr.mxu0 0.0
      %410 = vmatpush2.msra.mxu0 0.0
      %411 = vmatprep.subr.mxu0 0.0
      %412 = vmatpush2.msra.mxu0 0.0
      %413 = vmatprep.subr.mxu0 0.0
      %414 = vmatpush2.msra.mxu0 0.0
      %415 = vmatprep.subr.mxu0 0.0
      %416 = vmatpush2.msra.mxu0 0.0
      %417 = vmatprep.subr.mxu0 0.0
      %418 = vmatpush2.msra.mxu0 0.0
      %419 = vmatprep.subr.mxu0 0.0
      %420 = vmatpush2.msra.mxu0 0.0
      %421 = vmatprep.subr.mxu0 0.0
      %422 = vmatpush2.msra.mxu0 0.0
      %423 = vmatprep.subr.mxu0 0.0
      %424 = vmatpush2.msra.mxu0 0.0
      %425 = vmatprep.subr.mxu0 0.0
      %426 = vmatpush2.msra.mxu0 0.0
      %427 = vmatprep.subr.mxu0 0.0
      %428 = vmatpush2.msra.mxu0 0.0
      %429 = vmatprep.subr.mxu0 0.0
      %430 = vmatpush2.msra.mxu0 0.0
      %431 = vmatprep.subr.mxu0 0.0
      %432 = vmatpush2.msra.mxu0 0.0
      %433 = vmatprep.subr.mxu0 0.0
      %434 = vmatpush2.msra.mxu0 0.0
      %435 = vmatprep.subr.mxu0 0.0
      %436 = vmatpush2.msra.mxu0 0.0
      %437 = vmatprep.mubr.f32.mxu0 0.0
      %438 = vmatmul.mubr.f32.gmra.mxu0 %v230
      %v439 = vpop.f32.mrf.mxu0
      %v440 = vadd.f32 0.0, %v439
      %v441 = vpop.f32.mrf.mxu0
      %442 = vmatprep.mubr.f32.mxu0 0.0
      %443 = vmatmul.mubr.f32.gmra.mxu0 %v233
      %v444 = vpop.f32.mrf.mxu0
      %v445 = vadd.f32 0.0, %v444
      %v446 = vpop.f32.mrf.mxu0
      %447 = vmatprep.mubr.f32.mxu0 0.0
      %448 = vmatmul.mubr.f32.gmra.mxu0 %v236
      %v449 = vpop.f32.mrf.mxu0
      %v450 = vadd.f32 0.0, %v449
      %v451 = vpop.f32.mrf.mxu0
      %452 = vmatprep.mubr.f32.mxu0 0.0
      %453 = vmatmul.mubr.f32.gmra.mxu0 %v239
      %v454 = vpop.f32.mrf.mxu0
      %v455 = vadd.f32 0.0, %v454
      %v456 = vpop.f32.mrf.mxu0
      %457 = vdwg.mxu0
      %s458 = scalar_lea.vmem %s178, 32
      %459 = vst.msk [vmem:[%s458] sm:$0xff] %vm326, %v440
      %460 = vst.msk [vmem:[%s458 + $0x8] sm:$0xff] %vm326, %v445
      %461 = vst.msk [vmem:[%s458 + $0x10] sm:$0xff] %vm326, %v450
      %462 = vst.msk [vmem:[%s458 + $0x18] sm:$0xff] %vm326, %v455
      %s463 = scalar_lea.vmem %s168, 8
      %v464 = vld [vmem:[%s463] sm:$0xf]
      %v465 = vlaneseq
      %v466 = vshrl.u32 %v465, 7
      %v467 = vsub.s32 0, %v466
      %v468 = vrot.slane %v464, %v467
      %vm469 = vcmp.eq.s32.totalorder %v468, %v185
      %vm470 = vcmp.eq.s32.totalorder %v468, %v186
      %v471 = vsel %vm469, 1, 0
      %v472 = vsel %vm470, 1, 0
      %v473 = vlaneseq
      %v474 = vshrl.u32 %v473, 7
      %v475 = vsub.s32 1, %v474
      %v476 = vrot.slane %v464, %v475
      %vm477 = vcmp.eq.s32.totalorder %v476, %v185
      %vm478 = vcmp.eq.s32.totalorder %v476, %v186
      %v479 = vsel %vm477, 1, 0
      %v480 = vsel %vm478, 1, 0
      %v481 = vadd.s32 %v471, %v479
      %v482 = vadd.s32 %v472, %v480
      %v483 = vlaneseq
      %v484 = vshrl.u32 %v483, 7
      %v485 = vsub.s32 2, %v484
      %v486 = vrot.slane %v464, %v485
      %vm487 = vcmp.eq.s32.totalorder %v486, %v185
      %vm488 = vcmp.eq.s32.totalorder %v486, %v186
      %v489 = vsel %vm487, 1, 0
      %v490 = vsel %vm488, 1, 0
      %v491 = vadd.s32 %v481, %v489
      %v492 = vadd.s32 %v482, %v490
      %v493 = vlaneseq
      %v494 = vshrl.u32 %v493, 7
      %v495 = vsub.s32 3, %v494
      %v496 = vrot.slane %v464, %v495
      %vm497 = vcmp.eq.s32.totalorder %v496, %v185
      %vm498 = vcmp.eq.s32.totalorder %v496, %v186
      %v499 = vsel %vm497, 1, 0
      %v500 = vsel %vm498, 1, 0
      %v501 = vadd.s32 %v491, %v499
      %v502 = vadd.s32 %v492, %v500
      %v503 = vcvt.s32.f32 %v501
      %v504 = vcvt.s32.f32 %v502
      %505 = vmatprep.subr.mxu0 0.0
      %506 = vmatpush1.msra.mxu0 0.0
      %507 = vmatprep.subr.mxu0 0.0
      %508 = vmatpush1.msra.mxu0 0.0
      %509 = vmatprep.subr.mxu0 0.0
      %510 = vmatpush1.msra.mxu0 0.0
      %511 = vmatprep.subr.mxu0 0.0
      %512 = vmatpush1.msra.mxu0 0.0
      %513 = vmatprep.subr.mxu0 0.0
      %514 = vmatpush1.msra.mxu0 0.0
      %515 = vmatprep.subr.mxu0 0.0
      %516 = vmatpush1.msra.mxu0 0.0
      %517 = vmatprep.subr.mxu0 0.0
      %518 = vmatpush1.msra.mxu0 0.0
      %519 = vmatprep.subr.mxu0 0.0
      %520 = vmatpush1.msra.mxu0 0.0
      %521 = vmatprep.subr.mxu0 0.0
      %522 = vmatpush1.msra.mxu0 0.0
      %523 = vmatprep.subr.mxu0 0.0
      %524 = vmatpush1.msra.mxu0 0.0
      %525 = vmatprep.subr.mxu0 0.0
      %526 = vmatpush1.msra.mxu0 0.0
      %527 = vmatprep.subr.mxu0 0.0
      %528 = vmatpush1.msra.mxu0 0.0
      %529 = vmatprep.subr.mxu0 0.0
      %530 = vmatpush1.msra.mxu0 0.0
      %531 = vmatprep.subr.mxu0 0.0
      %532 = vmatpush1.msra.mxu0 0.0
      %533 = vmatprep.subr.mxu0 0.0
      %534 = vmatpush1.msra.mxu0 %v504
      %535 = vmatprep.subr.mxu0 0.0
      %536 = vmatpush1.msra.mxu0 %v503
      %537 = vmatprep.subr.mxu0 0.0
      %538 = vmatpush2.msra.mxu0 0.0
      %539 = vmatprep.subr.mxu0 0.0
      %540 = vmatpush2.msra.mxu0 0.0
      %541 = vmatprep.subr.mxu0 0.0
      %542 = vmatpush2.msra.mxu0 0.0
      %543 = vmatprep.subr.mxu0 0.0
      %544 = vmatpush2.msra.mxu0 0.0
      %545 = vmatprep.subr.mxu0 0.0
      %546 = vmatpush2.msra.mxu0 0.0
      %547 = vmatprep.subr.mxu0 0.0
      %548 = vmatpush2.msra.mxu0 0.0
      %549 = vmatprep.subr.mxu0 0.0
      %550 = vmatpush2.msra.mxu0 0.0
      %551 = vmatprep.subr.mxu0 0.0
      %552 = vmatpush2.msra.mxu0 0.0
      %553 = vmatprep.subr.mxu0 0.0
      %554 = vmatpush2.msra.mxu0 0.0
      %555 = vmatprep.subr.mxu0 0.0
      %556 = vmatpush2.msra.mxu0 0.0
      %557 = vmatprep.subr.mxu0 0.0
      %558 = vmatpush2.msra.mxu0 0.0
      %559 = vmatprep.subr.mxu0 0.0
      %560 = vmatpush2.msra.mxu0 0.0
      %561 = vmatprep.subr.mxu0 0.0
      %562 = vmatpush2.msra.mxu0 0.0
      %563 = vmatprep.subr.mxu0 0.0
      %564 = vmatpush2.msra.mxu0 0.0
      %565 = vmatprep.subr.mxu0 0.0
      %566 = vmatpush2.msra.mxu0 0.0
      %567 = vmatprep.subr.mxu0 0.0
      %568 = vmatpush2.msra.mxu0 0.0
      %569 = vmatprep.mubr.f32.mxu0 0.0
      %570 = vmatmul.mubr.f32.gmra.mxu0 %v230
      %v571 = vpop.f32.mrf.mxu0
      %v572 = vadd.f32 0.0, %v571
      %v573 = vpop.f32.mrf.mxu0
      %574 = vmatprep.mubr.f32.mxu0 0.0
      %575 = vmatmul.mubr.f32.gmra.mxu0 %v233
      %v576 = vpop.f32.mrf.mxu0
      %v577 = vadd.f32 0.0, %v576
      %v578 = vpop.f32.mrf.mxu0
      %579 = vmatprep.mubr.f32.mxu0 0.0
      %580 = vmatmul.mubr.f32.gmra.mxu0 %v236
      %v581 = vpop.f32.mrf.mxu0
      %v582 = vadd.f32 0.0, %v581
      %v583 = vpop.f32.mrf.mxu0
      %584 = vmatprep.mubr.f32.mxu0 0.0
      %585 = vmatmul.mubr.f32.gmra.mxu0 %v239
      %v586 = vpop.f32.mrf.mxu0
      %v587 = vadd.f32 0.0, %v586
      %v588 = vpop.f32.mrf.mxu0
      %589 = vdwg.mxu0
      %s590 = scalar_lea.vmem %s178, 64
      %591 = vst.msk [vmem:[%s590] sm:$0xff] %vm326, %v572
      %592 = vst.msk [vmem:[%s590 + $0x8] sm:$0xff] %vm326, %v577
      %593 = vst.msk [vmem:[%s590 + $0x10] sm:$0xff] %vm326, %v582
      %594 = vst.msk [vmem:[%s590 + $0x18] sm:$0xff] %vm326, %v587
      %s595 = smul.u32 3, %s17
      %p596 = scmp.lt.s32.totalorder %s595, 5
      %s597 = scalar_select %p596, %s595, 5
      %p598 = scmp.lt.s32.totalorder %s18, 0
      %s599 = scalar_select %p598, %s18, 0
      %s600 = smul.addr %s597, 4
      %s601 = sadd.s32 %s599, %s600
      %s602 = smul.addr %s601, 8
      %s603 = scalar_lea.vmem %s2, %s602
      // Predicated region
      $region29: #{state_embedder_forward.1} parent=27 // pred_check
        %p604 = pneg %p94
      $region30: #{state_embedder_forward.1} parent=27 // pred_check_branch
        %606 = sbr.rel (%p604) target = $region32
      $region31: #{state_embedder_forward.1} parent=27 // pred_region
        %s607 = smul.u32 3, %s17
      $region32: #{state_embedder_forward.1} parent=27 // pred_fallthru
        _
    $region28: #{state_embedder_forward.1} parent=5 // pred_fallthru
      _
    %p608 = scmp.le.s32.totalorder 2, %s8
    // Predicated region
    $region33: #{state_embedder_forward.1} parent=5 // pred_check
      %p609 = pneg %p608
    $region34: #{state_embedder_forward.1} parent=5 // pred_check_branch
      %611 = sbr.rel (%p609) target = $region36
    $region35: #{state_embedder_forward.1} parent=5 // pred_region
      %s612 = ssub.s32 %s8, 2
      // Predicated region
      $region37: #{state_embedder_forward.1} parent=35 // pred_check
        %p613 = pneg %p100
      $region38: #{state_embedder_forward.1} parent=35 // pred_check_branch
        %615 = sbr.rel (%p613) target = $region40
      $region39: #{state_embedder_forward.1} parent=35 // pred_region
        %s616 = smul.u32 3, %s19
        %p617 = scmp.lt.s32.totalorder %s616, 5
        %s618 = scalar_select %p617, %s616, 5
        %p619 = scmp.lt.s32.totalorder %s20, 0
        %s620 = scalar_select %p619, %s20, 0
        %s621 = smul.addr %s618, 4
        %s622 = sadd.s32 %s620, %s621
        %s623 = smul.addr %s622, 8
        %s624 = scalar_lea.vmem %s2, %s623
      $region40: #{state_embedder_forward.1} parent=35 // pred_fallthru
        _
    $region36: #{state_embedder_forward.1} parent=5 // pred_fallthru
      _
  $region6: #{state_embedder_forward.1} parent=0 // loop_footer
    %s12 = sadd.s32 1, %s8
  $region7: #{state_embedder_forward.1} parent=0 // loop_footer_branch
    %7 = sbr.rel target = $region3
  $region8: #{state_embedder_forward.1} parent=0 // loop_exit
    _

</llo_original>
